<compile_context>
chip_gen: v7x
topology: tpu7x:2x2x1
jax: 0.10.0
libtpu: 0.0.40
codegen_flags: <defaults>
</compile_context>

<pallas_src>
import functools

import jax
import jax.numpy as jnp
from jax.experimental import pallas as pl
from jax.experimental.pallas import tpu as pltpu

LANES = 128      # vreg lane width; the weight's output dim is padded to this once.
MAX_TB = 1024    # max batch-tile rows (mem-bound sweet spot ~1024-2048; tiny VMEM use)


def _round_up(x, m):
    return ((x + m - 1) // m) * m


def linear_kernel(x_ref, wt_ref, b_ref, o_ref):
    # x_ref : (TB, D)      VMEM tile (batch block, pipelined)
    # wt_ref: (D, 128)     VMEM tile, resident across the batch grid (lane-padded)
    # b_ref : (1, O)       VMEM tile, resident (true output width)
    # o_ref : (TB, O)      output tile at the true output width (contiguous writeback)
    o = o_ref.shape[-1]
    acc = jnp.dot(x_ref[...], wt_ref[...], preferred_element_type=jnp.float32)
    o_ref[...] = (acc[:, :o] + b_ref[...]).astype(o_ref.dtype)


def prepare_params(weight, bias, *, use_bf16=False):
    """One-time parameter prep (do at init, not per forward call).

    Args:
      weight:   (O, D) f32, PyTorch nn.Linear layout.
      bias:     (O,)   f32.
      use_bf16: optional bandwidth optimization (changes numerics ~1e-3 rel).
    Returns:
      wt_pad: (D, 128) — transposed, zero-padded to the 128-lane vreg width.
      b_row:  (1, O) f32 — bias row at the true output width.
    """
    o, d = weight.shape
    o_pad = _round_up(max(o, 1), LANES)
    w_dtype = jnp.bfloat16 if use_bf16 else jnp.float32
    wt_pad = jnp.zeros((d, o_pad), w_dtype).at[:, :o].set(weight.T.astype(w_dtype))
    b_row = bias.astype(jnp.float32).reshape(1, o)
    return wt_pad, b_row


@functools.partial(jax.jit, static_argnames=("out_dim",))
def cafenet_forward(x, wt_pad, b_row, out_dim):
    """Pallas-backed equivalent of nn.Linear(inputDim, outputDim)(x).

    Args:
      x:       (B, D) f32 flattened images.
      wt_pad:  (D, 128) from prepare_params (f32 or bf16).
      b_row:   (1, O) f32 from prepare_params.
      out_dim: true output dimension O (static).
    Returns:
      (B, out_dim) f32, matching torch.nn.Linear(x).
    """
    B, D = x.shape
    o_pad = wt_pad.shape[1]
    O = out_dim

    if wt_pad.dtype == jnp.bfloat16:
        x = x.astype(jnp.bfloat16)   # bf16 read path; accumulation stays f32

    # Batch tile: multiple of 8 sublanes, capped at MAX_TB, sized ~B/2 so the
    # "parallel" batch axis has >= 2 steps (both TCs on v7x) when possible.
    # No wrapper-side padding: Pallas masks the boundary block.
    half = -(-B // 2)
    tb = max(8, min(MAX_TB, _round_up(half, 8)))
    grid = (pl.cdiv(B, tb),)

    cost = pl.CostEstimate(
        flops=2 * B * D * O,
        transcendentals=0,
        bytes_accessed=(x.dtype.itemsize * B * D
                        + wt_pad.dtype.itemsize * D * o_pad
                        + 4 * O
                        + 4 * B * O),
    )

    return pl.pallas_call(
        linear_kernel,
        out_shape=jax.ShapeDtypeStruct((B, O), jnp.float32),
        grid=grid,
        in_specs=[
            pl.BlockSpec((tb, D), lambda i: (i, 0)),      # x: batch-tiled, pipelined
            pl.BlockSpec((D, o_pad), lambda i: (0, 0)),   # weight: resident across grid
            pl.BlockSpec((1, O), lambda i: (0, 0)),       # bias: resident across grid
        ],
        out_specs=pl.BlockSpec((tb, O), lambda i: (i, 0)),  # true-width output block
        compiler_params=pltpu.CompilerParams(
            dimension_semantics=("parallel",),            # shard batch across TCs (v7x)
        ),
        cost_estimate=cost,
    )(x, wt_pad, b_row)


if __name__ == "__main__":
    # Small shapes consistent with the module:
    #   IMAGE_DIMS -> (16, 16)  => inputDim = 256
    #   EXPRESSION_DICT of 8 expressions => outputDim = 8
    B, H, W, O = 8, 16, 16, 8
    D = H * W

    key = jax.random.PRNGKey(0)
    kx, kw, kb = jax.random.split(key, 3)

    # Deterministic parameter init (mirrors nn.Linear default: U(-1/sqrt(D), 1/sqrt(D)))
    bound = 1.0 / jnp.sqrt(jnp.float32(D))
    weight = jax.random.uniform(kw, (O, D), jnp.float32, minval=-bound, maxval=bound)
    bias = jax.random.uniform(kb, (O,), jnp.float32, minval=-bound, maxval=bound)

    # Input: flattened grayscale images, shape (B, D)
    x = jax.random.normal(kx, (B, D), jnp.float32)

    # One-time parameter prep (hoisted out of the forward call).
    wt_pad, b_row = prepare_params(weight, bias)   # use_bf16=True for the bandwidth path
    wt_pad, b_row = jax.block_until_ready((wt_pad, b_row))

    y = cafenet_forward(x, wt_pad, b_row, out_dim=O)
    y = jax.block_until_ready(y)

    # Correctness check against plain-JAX reference of nn.Linear semantics.
    y_ref = x @ weight.T + bias
    assert y.shape == (B, O)
    assert jnp.allclose(y, y_ref, atol=1e-5, rtol=1e-5), "mismatch vs reference"

    print("KERNEL_OK")
</pallas_src>

<mosaic_0001>
module attributes {stable_mosaic.version = 11 : i64} {
  func.func @linear_kernel(%arg0: i32, %arg1: memref<8x256xf32, #tpu.memory_space<vmem>>, %arg2: memref<256x128xf32, #tpu.memory_space<vmem>>, %arg3: memref<1x8xf32, #tpu.memory_space<vmem>>, %arg4: memref<8x8xf32, #tpu.memory_space<vmem>>) attributes {dimension_semantics = [#tpu.dimension_semantics<parallel>], iteration_bounds = array<i64: 1>, scalar_prefetch = 0 : i64, scratch_operands = 0 : i64, tpu.core_type = #tpu.core_type<tc>, window_params = [{transform_indices = @transform_0, window_bounds = array<i64: 8, 256>}, {pipeline_mode = #tpu.pipeline_mode<synchronous>, transform_indices = @transform_1, window_bounds = array<i64: 256, 128>}, {pipeline_mode = #tpu.pipeline_mode<synchronous>, transform_indices = @transform_2, window_bounds = array<i64: 1, 8>}, {transform_indices = @transform_3, window_bounds = array<i64: 8, 8>}]} {
    %c0 = arith.constant 0 : index
    %c0_0 = arith.constant 0 : index
    %0 = vector.load %arg1[%c0, %c0_0] : memref<8x256xf32, #tpu.memory_space<vmem>>, vector<8x256xf32>
    %c0_1 = arith.constant 0 : index
    %c0_2 = arith.constant 0 : index
    %1 = vector.load %arg2[%c0_1, %c0_2] : memref<256x128xf32, #tpu.memory_space<vmem>>, vector<256x128xf32>
    %cst = arith.constant dense<0.000000e+00> : vector<8x128xf32>
    %2 = tpu.matmul %0, %1, %cst {dimension_numbers = #tpu.dot_dimension_numbers<[1], [0], [0], [1], [0, 0, 1, 1], [], []>} : vector<8x256xf32>, vector<256x128xf32>, vector<8x128xf32> -> vector<8x128xf32>
    %3 = vector.extract_strided_slice %2 {offsets = [0, 0], sizes = [8, 8], strides = [1, 1]} : vector<8x128xf32> to vector<8x8xf32>
    %c0_3 = arith.constant 0 : index
    %c0_4 = arith.constant 0 : index
    %4 = vector.load %arg3[%c0_3, %c0_4] : memref<1x8xf32, #tpu.memory_space<vmem>>, vector<1x8xf32>
    %5 = vector.broadcast %4 : vector<1x8xf32> to vector<8x8xf32>
    %6 = arith.addf %3, %5 : vector<8x8xf32>
    %c0_5 = arith.constant 0 : index
    %c0_6 = arith.constant 0 : index
    %7 = vector.load %arg4[%c0_5, %c0_6] : memref<8x8xf32, #tpu.memory_space<vmem>>, vector<8x8xf32>
    tpu.vector_store %arg4[%c0_5, %c0_6], %6 {strides = array<i32>} : memref<8x8xf32, #tpu.memory_space<vmem>>, vector<8x8xf32>,
    return
  }
  func.func @transform_0(%arg0: i32) -> (i32, i32) {
    %c0_i32 = arith.constant 0 : i32
    %c0_i32_0 = arith.constant 0 : i32
    return %arg0, %c0_i32 : i32, i32
  }
  func.func @transform_1(%arg0: i32) -> (i32, i32) {
    %c0_i32 = arith.constant 0 : i32
    %c0_i32_0 = arith.constant 0 : i32
    %c0_i32_1 = arith.constant 0 : i32
    return %c0_i32, %c0_i32_0 : i32, i32
  }
  func.func @transform_2(%arg0: i32) -> (i32, i32) {
    %c0_i32 = arith.constant 0 : i32
    %c0_i32_0 = arith.constant 0 : i32
    %c0_i32_1 = arith.constant 0 : i32
    return %c0_i32, %c0_i32_0 : i32, i32
  }
  func.func @transform_3(%arg0: i32) -> (i32, i32) {
    %c0_i32 = arith.constant 0 : i32
    %c0_i32_0 = arith.constant 0 : i32
    return %arg0, %c0_i32 : i32, i32
  }
}

</mosaic_0001>

<llo_original>
// kernel: cafenet_forward.1
$region0: #{cafenet_forward.1}
  #allocation0 [shape = 'u32[]', space=smem, size = 0x4, offset = 0x4, fixed_abs, tag = 'smem constant byte address 0x4 - core index']
  #allocation1 [shape = 'u32[144,128]{1,0:T(1,128)}', space=vmem, size = 0x12000, scoped, tag = 'internal scratch']
  %s0 = inlined_call_operand.hbm [shape: f32[8,256], index: 0, kind: input, shape index: {}]
  %s1 = inlined_call_operand.hbm [shape: f32[256,128], index: 1, kind: input, shape index: {}]
  %s2 = inlined_call_operand.vmem [shape: f32[1,8], index: 2, kind: input, shape index: {}]
  %s3 = inlined_call_operand.hbm [shape: f32[8,8], index: 3, kind: output, shape index: {}]
  %s4 = sld [smem:[#allocation0]]
  $region30: #{cafenet_forward.1} parent=0
    _
  %s6 = ssub.s32 1, %s4
  %s7 = scalar_select 0, %s6, %s4
  $region1: #{cafenet_forward.1} parent=0
    #allocation2 [shape = 'u8[8192]{0}', space=vmem, size = 0x2000, scoped, tag = 'input window, operand 0, single buffered']
    #allocation3 [shape = 's32[1]{0}', space=sflag, size = 0x4, scoped, tag = 'scoped memory for cafenet_forward.1']
    #allocation4 [shape = 's32[1]{0}', space=sflag, size = 0x4, scoped, tag = 'scoped memory for cafenet_forward.1']
    #allocation5 [shape = 'u8[131072]{0}', space=vmem, size = 0x20000, scoped, tag = 'input window, operand 1, single buffered']
    #allocation6 [shape = 's32[1]{0}', space=sflag, size = 0x4, scoped, tag = 'scoped memory for cafenet_forward.1']
    #allocation7 [shape = 'u8[4096]{0}', space=vmem, size = 0x1000, scoped, tag = 'output window, operand 0, single buffered']
    %8 = vsyncpa [#allocation3], 0
    %9 = vsyncpa [#allocation6], 0
    %10 = vsyncpa [#allocation4], 0
    // Predicated region
    $region2: #{cafenet_forward.1} parent=1 // pred_check
      _
    $region3: #{cafenet_forward.1} parent=1 // pred_check_branch
      %12 = sbr.rel (0) target = $region5
    $region4: #{cafenet_forward.1} parent=1 // pred_region
      %s14 = ssub.s32 256, 256
      %15 = vsyncadd [#allocation3], %s14
      %s17 = sshll.u32 [#allocation2], 4
      %s18 = int_to_ptr.vmem [resolvable:$true] %s17
      %20 = dma.hbm_to_vmem [thread:$0]  %s0, 256, %s18, [#allocation3]
    $region5: #{cafenet_forward.1} parent=1 // pred_fallthru
      _
    // Predicated region
    $region6: #{cafenet_forward.1} parent=1 // pred_check
      _
    $region7: #{cafenet_forward.1} parent=1 // pred_check_branch
      %22 = sbr.rel (0) target = $region9
    $region8: #{cafenet_forward.1} parent=1 // pred_region
      %s24 = ssub.s32 4096, 4096
      %25 = vsyncadd [#allocation6], %s24
      %s26 = sshll.u32 [#allocation5], 4
      %s27 = int_to_ptr.vmem [resolvable:$true] %s26
      %32 = dma.hbm_to_vmem [thread:$0]  %s1, 4096, %s27, [#allocation6], 128, 128, 8
    $region9: #{cafenet_forward.1} parent=1 // pred_fallthru
      _
    // Predicated region
    $region10: #{cafenet_forward.1} parent=1 // pred_check
      _
    $region11: #{cafenet_forward.1} parent=1 // pred_check_branch
      %34 = sbr.rel (0) target = $region13
    $region12: #{cafenet_forward.1} parent=1 // pred_region
      _
    $region13: #{cafenet_forward.1} parent=1 // pred_fallthru
      _
    // Predicated region
    $region14: #{cafenet_forward.1} parent=1 // pred_check
      _
    $region15: #{cafenet_forward.1} parent=1 // pred_check_branch
      %36 = sbr.rel (0) target = $region17
    $region16: #{cafenet_forward.1} parent=1 // pred_region
      %37 = dma.done [#allocation3], 256
    $region17: #{cafenet_forward.1} parent=1 // pred_fallthru
      _
    // Predicated region
    $region18: #{cafenet_forward.1} parent=1 // pred_check
      _
    $region19: #{cafenet_forward.1} parent=1 // pred_check_branch
      %39 = sbr.rel (0) target = $region21
    $region20: #{cafenet_forward.1} parent=1 // pred_region
      %40 = dma.done [#allocation6], 4096
    $region21: #{cafenet_forward.1} parent=1 // pred_fallthru
      _
    %v41 = vld [vmem:[#allocation2] sm:$0xff]
    %v42 = vld [vmem:[#allocation2 + $0x8] sm:$0xff]
    %v43 = vld [vmem:[#allocation5] sm:$0xff]
    %v44 = vld [vmem:[#allocation5 + $0x8] sm:$0xff]
    %v45 = vld [vmem:[#allocation5 + $0x10] sm:$0xff]
    %v46 = vld [vmem:[#allocation5 + $0x18] sm:$0xff]
    %v47 = vld [vmem:[#allocation5 + $0x20] sm:$0xff]
    %v48 = vld [vmem:[#allocation5 + $0x28] sm:$0xff]
    %v49 = vld [vmem:[#allocation5 + $0x30] sm:$0xff]
    %v50 = vld [vmem:[#allocation5 + $0x38] sm:$0xff]
    %v51 = vld [vmem:[#allocation5 + $0x40] sm:$0xff]
    %v52 = vld [vmem:[#allocation5 + $0x48] sm:$0xff]
    %v53 = vld [vmem:[#allocation5 + $0x50] sm:$0xff]
    %v54 = vld [vmem:[#allocation5 + $0x58] sm:$0xff]
    %v55 = vld [vmem:[#allocation5 + $0x60] sm:$0xff]
    %v56 = vld [vmem:[#allocation5 + $0x68] sm:$0xff]
    %v57 = vld [vmem:[#allocation5 + $0x70] sm:$0xff]
    %v58 = vld [vmem:[#allocation5 + $0x78] sm:$0xff]
    %v59 = vld [vmem:[#allocation5 + $0x80] sm:$0xff]
    %v60 = vld [vmem:[#allocation5 + $0x88] sm:$0xff]
    %v61 = vld [vmem:[#allocation5 + $0x90] sm:$0xff]
    %v62 = vld [vmem:[#allocation5 + $0x98] sm:$0xff]
    %v63 = vld [vmem:[#allocation5 + $0xa0] sm:$0xff]
    %v64 = vld [vmem:[#allocation5 + $0xa8] sm:$0xff]
    %v65 = vld [vmem:[#allocation5 + $0xb0] sm:$0xff]
    %v66 = vld [vmem:[#allocation5 + $0xb8] sm:$0xff]
    %v67 = vld [vmem:[#allocation5 + $0xc0] sm:$0xff]
    %v68 = vld [vmem:[#allocation5 + $0xc8] sm:$0xff]
    %v69 = vld [vmem:[#allocation5 + $0xd0] sm:$0xff]
    %v70 = vld [vmem:[#allocation5 + $0xd8] sm:$0xff]
    %v71 = vld [vmem:[#allocation5 + $0xe0] sm:$0xff]
    %v72 = vld [vmem:[#allocation5 + $0xe8] sm:$0xff]
    %v73 = vld [vmem:[#allocation5 + $0xf0] sm:$0xff]
    %v74 = vld [vmem:[#allocation5 + $0xf8] sm:$0xff]
    %75 = vmatprep.subr.mxu0 0.0
    %76 = vmatpush1.msra.mxu0 %v43
    %77 = vmatprep.subr.mxu0 0.0
    %78 = vmatpush1.msra.mxu0 %v44
    %79 = vmatprep.subr.mxu0 0.0
    %80 = vmatpush1.msra.mxu0 %v45
    %81 = vmatprep.subr.mxu0 0.0
    %82 = vmatpush1.msra.mxu0 %v46
    %83 = vmatprep.subr.mxu0 0.0
    %84 = vmatpush1.msra.mxu0 %v47
    %85 = vmatprep.subr.mxu0 0.0
    %86 = vmatpush1.msra.mxu0 %v48
    %87 = vmatprep.subr.mxu0 0.0
    %88 = vmatpush1.msra.mxu0 %v49
    %89 = vmatprep.subr.mxu0 0.0
    %90 = vmatpush1.msra.mxu0 %v50
    %91 = vmatprep.subr.mxu0 0.0
    %92 = vmatpush1.msra.mxu0 %v51
    %93 = vmatprep.subr.mxu0 0.0
    %94 = vmatpush1.msra.mxu0 %v52
    %95 = vmatprep.subr.mxu0 0.0
    %96 = vmatpush1.msra.mxu0 %v53
    %97 = vmatprep.subr.mxu0 0.0
    %98 = vmatpush1.msra.mxu0 %v54
    %99 = vmatprep.subr.mxu0 0.0
    %100 = vmatpush1.msra.mxu0 %v55
    %101 = vmatprep.subr.mxu0 0.0
    %102 = vmatpush1.msra.mxu0 %v56
    %103 = vmatprep.subr.mxu0 0.0
    %104 = vmatpush1.msra.mxu0 %v57
    %105 = vmatprep.subr.mxu0 0.0
    %106 = vmatpush1.msra.mxu0 %v58
    %107 = vmatprep.subr.mxu0 0.0
    %108 = vmatpush1.msra.mxu0 %v59
    %109 = vmatprep.subr.mxu0 0.0
    %110 = vmatpush1.msra.mxu0 %v60
    %111 = vmatprep.subr.mxu0 0.0
    %112 = vmatpush1.msra.mxu0 %v61
    %113 = vmatprep.subr.mxu0 0.0
    %114 = vmatpush1.msra.mxu0 %v62
    %115 = vmatprep.subr.mxu0 0.0
    %116 = vmatpush1.msra.mxu0 %v63
    %117 = vmatprep.subr.mxu0 0.0
    %118 = vmatpush1.msra.mxu0 %v64
    %119 = vmatprep.subr.mxu0 0.0
    %120 = vmatpush1.msra.mxu0 %v65
    %121 = vmatprep.subr.mxu0 0.0
    %122 = vmatpush1.msra.mxu0 %v66
    %123 = vmatprep.subr.mxu0 0.0
    %124 = vmatpush1.msra.mxu0 %v67
    %125 = vmatprep.subr.mxu0 0.0
    %126 = vmatpush1.msra.mxu0 %v68
    %127 = vmatprep.subr.mxu0 0.0
    %128 = vmatpush1.msra.mxu0 %v69
    %129 = vmatprep.subr.mxu0 0.0
    %130 = vmatpush1.msra.mxu0 %v70
    %131 = vmatprep.subr.mxu0 0.0
    %132 = vmatpush1.msra.mxu0 %v71
    %133 = vmatprep.subr.mxu0 0.0
    %134 = vmatpush1.msra.mxu0 %v72
    %135 = vmatprep.subr.mxu0 0.0
    %136 = vmatpush1.msra.mxu0 %v73
    %137 = vmatprep.subr.mxu0 0.0
    %138 = vmatpush1.msra.mxu0 %v74
    %139 = vmatprep.mubr.f32.mxu0 %v42
    %140 = vmatmul.mubr.f32.gmra.mrb[0].mxu0 %v41
    %v141 = vpop.f32.mrb[0].mxu0
    %v142 = vadd.f32 0.0, %v141
    %v143 = vpop.f32.mrb[0].mxu0
    %144 = vdwg.mxu0
    %v145 = vld [vmem:[%s2] sm:$0x1]
    %v147 = vlaneseq
    %v148 = vshrl.u32 %v147, 7
    %v149 = vsub.s32 0, %v148
    %v150 = vrot.slane %v145, %v149
    %v152 = vadd.f32 %v142, %v150
    %vm153 = vcmask 64512
    %154 = vst.msk [vmem:[#allocation7] sm:$0xff] %vm153, %v152
    // Predicated region
    $region22: #{cafenet_forward.1} parent=1 // pred_check
      _
    $region23: #{cafenet_forward.1} parent=1 // pred_check_branch
      %156 = sbr.rel (0) target = $region25
    $region24: #{cafenet_forward.1} parent=1 // pred_region
      %s158 = ssub.s32 128, 128
      %159 = vsyncadd [#allocation4], %s158
      %s161 = sshll.u32 [#allocation7], 4
      %s162 = int_to_ptr.vmem [resolvable:$true] %s161
      %164 = dma.vmem_to_hbm [thread:$0]  %s162, 128, %s3, [#allocation4]
    $region25: #{cafenet_forward.1} parent=1 // pred_fallthru
      _
    // Predicated region
    $region26: #{cafenet_forward.1} parent=1 // pred_check
      _
    $region27: #{cafenet_forward.1} parent=1 // pred_check_branch
      %166 = sbr.rel (0) target = $region29
    $region28: #{cafenet_forward.1} parent=1 // pred_region
      %167 = dma.done [#allocation4], 128
    $region29: #{cafenet_forward.1} parent=1 // pred_fallthru
      _
    %168 = vsyncpa [#allocation3], 1
    %169 = vsyncpa [#allocation6], 1
    %170 = vsyncpa [#allocation4], 1

</llo_original>
